<compile_context>
chip_gen: v6e
topology: v6e:2x2x1
jax: 0.10.0
libtpu: 0.0.40
codegen_flags: <defaults>
</compile_context>

<pallas_src>
import math

import jax
import jax.numpy as jnp
from jax.experimental import pallas as pl
from jax.experimental.pallas import tpu as pltpu


LANE_TILE = 4096  # max batch columns per grid step (multiple of 128)


def mlp_kernel(x_ref, w1_ref, b1_ref, w2_ref, b2_ref, w3_ref, b3_ref,
               w4_ref, b4_ref, o_ref):
    # x: (5, T) -- features in sublanes, batch in lanes.
    x = x_ref[...]

    # fc1 + relu : (5,5) @ (5,T) -> (5,T)
    h = jnp.dot(w1_ref[...], x, preferred_element_type=jnp.float32) + b1_ref[...]
    h = jnp.maximum(h, 0.0)
    # fc2 + relu : (4,5) @ (5,T) -> (4,T)
    h = jnp.dot(w2_ref[...], h, preferred_element_type=jnp.float32) + b2_ref[...]
    h = jnp.maximum(h, 0.0)
    # fc3 + relu : (3,4) @ (4,T) -> (3,T)
    h = jnp.dot(w3_ref[...], h, preferred_element_type=jnp.float32) + b3_ref[...]
    h = jnp.maximum(h, 0.0)
    # fc4 : (3,3) @ (3,T) -> (3,T)
    h = jnp.dot(w4_ref[...], h, preferred_element_type=jnp.float32) + b4_ref[...]

    # log_softmax over the feature axis (sublanes, axis 0) -- numerically stable.
    m = jnp.max(h, axis=0, keepdims=True)
    z = h - m
    lse = jnp.log(jnp.sum(jnp.exp(z), axis=0, keepdims=True))
    o_ref[...] = (z - lse).astype(o_ref.dtype)


def _resident_spec(shape):
    # Full-array block pinned to block (0, 0) for every grid step -> stays in VMEM.
    # Separate helper per operand avoids the late-binding-lambda pitfall.
    return pl.BlockSpec(shape, lambda i: (0, 0))


def nural_netwoek_2hl1g(x, params, lane_tile=LANE_TILE):
    """x: (N, 5) float32; params: PyTorch-convention weights (out,in), biases (out,1).

    Returns (N, 3) log-probabilities (float32)."""
    n = x.shape[0]
    # Adaptive lane tile: at most `lane_tile`, at least 128, and never wildly
    # larger than the batch itself.
    tile = min(lane_tile, pl.cdiv(n, 128) * 128)
    n_pad = pl.cdiv(n, tile) * tile

    # Transposed, lane-padded input: (5, N_pad). Padding columns are zeros and
    # produce finite (discarded) outputs.
    x_t = jnp.pad(x.T.astype(jnp.float32), ((0, 0), (0, n_pad - n)))

    w1, b1 = params["w1"], params["b1"]
    w2, b2 = params["w2"], params["b2"]
    w3, b3 = params["w3"], params["b3"]
    w4, b4 = params["w4"], params["b4"]

    in_specs = [
        pl.BlockSpec((5, tile), lambda i: (0, i)),   # x tile: batch blocked in lanes
        _resident_spec(w1.shape), _resident_spec(b1.shape),
        _resident_spec(w2.shape), _resident_spec(b2.shape),
        _resident_spec(w3.shape), _resident_spec(b3.shape),
        _resident_spec(w4.shape), _resident_spec(b4.shape),
    ]
    out_specs = pl.BlockSpec((3, tile), lambda i: (0, i))

    out_t = pl.pallas_call(
        mlp_kernel,
        grid=(n_pad // tile,),
        in_specs=in_specs,
        out_specs=out_specs,
        out_shape=jax.ShapeDtypeStruct((3, n_pad), jnp.float32),
        compiler_params=pltpu.CompilerParams(
            dimension_semantics=("parallel",),   # megacore-shard the batch axis
        ),
    )(x_t, w1, b1, w2, b2, w3, b3, w4, b4)

    # Back to (N, 3) row-major batch layout; drop lane padding.
    return out_t[:, :n].T


def init_params(key):
    """Deterministic init mimicking PyTorch nn.Linear default (uniform +-1/sqrt(fan_in)).

    Weights stored PyTorch-style as (out_features, in_features); biases as
    (out_features, 1) so they broadcast over the lane (batch) axis in-kernel."""
    sizes = [(5, 5), (5, 4), (4, 3), (3, 3)]  # (in, out) per layer
    params = {}
    keys = jax.random.split(key, 2 * len(sizes))
    for i, (fin, fout) in enumerate(sizes):
        bound = 1.0 / math.sqrt(fin)
        params[f"w{i+1}"] = jax.random.uniform(
            keys[2 * i], (fout, fin), jnp.float32, -bound, bound)
        params[f"b{i+1}"] = jax.random.uniform(
            keys[2 * i + 1], (fout, 1), jnp.float32, -bound, bound)
    return params


if __name__ == "__main__":
    key = jax.random.PRNGKey(0)
    k_x, k_p = jax.random.split(key)
    batch = 8
    x = jax.random.normal(k_x, (batch, 5), dtype=jnp.float32)
    params = init_params(k_p)

    out = nural_netwoek_2hl1g(x, params)
    out = jax.block_until_ready(out)

    # Sanity check against plain-JAX reference (PyTorch convention: y = x @ W.T + b).
    h = x
    for i in range(1, 5):
        h = h @ params[f"w{i}"].T + params[f"b{i}"][:, 0]
        if i < 4:
            h = jnp.maximum(h, 0.0)
    ref = jax.nn.log_softmax(h, axis=1)

    assert out.shape == (batch, 3)
    assert jnp.allclose(out, ref, atol=1e-5), "mismatch vs reference"

    print("KERNEL_OK")
</pallas_src>

<mosaic_0001>
module attributes {stable_mosaic.version = 11 : i64} {
  func.func @mlp_kernel(%arg0: i32, %arg1: memref<5x128xf32, #tpu.memory_space<vmem>>, %arg2: memref<5x5xf32, #tpu.memory_space<vmem>>, %arg3: memref<5x1xf32, #tpu.memory_space<vmem>>, %arg4: memref<4x5xf32, #tpu.memory_space<vmem>>, %arg5: memref<4x1xf32, #tpu.memory_space<vmem>>, %arg6: memref<3x4xf32, #tpu.memory_space<vmem>>, %arg7: memref<3x1xf32, #tpu.memory_space<vmem>>, %arg8: memref<3x3xf32, #tpu.memory_space<vmem>>, %arg9: memref<3x1xf32, #tpu.memory_space<vmem>>, %arg10: memref<3x128xf32, #tpu.memory_space<vmem>>) attributes {dimension_semantics = [#tpu.dimension_semantics<parallel>], iteration_bounds = array<i64: 1>, scalar_prefetch = 0 : i64, scratch_operands = 0 : i64, tpu.core_type = #tpu.core_type<tc>, window_params = [{transform_indices = @transform_0, window_bounds = array<i64: 5, 128>}, {pipeline_mode = #tpu.pipeline_mode<synchronous>, transform_indices = @transform_1, window_bounds = array<i64: 5, 5>}, {pipeline_mode = #tpu.pipeline_mode<synchronous>, transform_indices = @transform_2, window_bounds = array<i64: 5, 1>}, {pipeline_mode = #tpu.pipeline_mode<synchronous>, transform_indices = @transform_3, window_bounds = array<i64: 4, 5>}, {pipeline_mode = #tpu.pipeline_mode<synchronous>, transform_indices = @transform_4, window_bounds = array<i64: 4, 1>}, {pipeline_mode = #tpu.pipeline_mode<synchronous>, transform_indices = @transform_5, window_bounds = array<i64: 3, 4>}, {pipeline_mode = #tpu.pipeline_mode<synchronous>, transform_indices = @transform_6, window_bounds = array<i64: 3, 1>}, {pipeline_mode = #tpu.pipeline_mode<synchronous>, transform_indices = @transform_7, window_bounds = array<i64: 3, 3>}, {pipeline_mode = #tpu.pipeline_mode<synchronous>, transform_indices = @transform_8, window_bounds = array<i64: 3, 1>}, {transform_indices = @transform_9, window_bounds = array<i64: 3, 128>}]} {
    %c0 = arith.constant 0 : index
    %c0_0 = arith.constant 0 : index
    %0 = vector.load %arg1[%c0, %c0_0] : memref<5x128xf32, #tpu.memory_space<vmem>>, vector<5x128xf32>
    %c0_1 = arith.constant 0 : index
    %c0_2 = arith.constant 0 : index
    %1 = vector.load %arg2[%c0_1, %c0_2] : memref<5x5xf32, #tpu.memory_space<vmem>>, vector<5x5xf32>
    %cst = arith.constant dense<0.000000e+00> : vector<5x128xf32>
    %2 = tpu.matmul %1, %0, %cst {dimension_numbers = #tpu.dot_dimension_numbers<[1], [0], [0], [1], [0, 0, 1, 1], [], []>} : vector<5x5xf32>, vector<5x128xf32>, vector<5x128xf32> -> vector<5x128xf32>
    %c0_3 = arith.constant 0 : index
    %c0_4 = arith.constant 0 : index
    %3 = vector.load %arg3[%c0_3, %c0_4] : memref<5x1xf32, #tpu.memory_space<vmem>>, vector<5x1xf32>
    %4 = vector.broadcast %3 : vector<5x1xf32> to vector<5x128xf32>
    %5 = arith.addf %2, %4 : vector<5x128xf32>
    %cst_5 = arith.constant 0.000000e+00 : f32
    %6 = vector.broadcast %cst_5 : f32 to vector<5x128xf32>
    %7 = arith.maximumf %5, %6 : vector<5x128xf32>
    %c0_6 = arith.constant 0 : index
    %c0_7 = arith.constant 0 : index
    %8 = vector.load %arg4[%c0_6, %c0_7] : memref<4x5xf32, #tpu.memory_space<vmem>>, vector<4x5xf32>
    %cst_8 = arith.constant dense<0.000000e+00> : vector<4x128xf32>
    %9 = tpu.matmul %8, %7, %cst_8 {dimension_numbers = #tpu.dot_dimension_numbers<[1], [0], [0], [1], [0, 0, 1, 1], [], []>} : vector<4x5xf32>, vector<5x128xf32>, vector<4x128xf32> -> vector<4x128xf32>
    %c0_9 = arith.constant 0 : index
    %c0_10 = arith.constant 0 : index
    %10 = vector.load %arg5[%c0_9, %c0_10] : memref<4x1xf32, #tpu.memory_space<vmem>>, vector<4x1xf32>
    %11 = vector.broadcast %10 : vector<4x1xf32> to vector<4x128xf32>
    %12 = arith.addf %9, %11 : vector<4x128xf32>
    %cst_11 = arith.constant 0.000000e+00 : f32
    %13 = vector.broadcast %cst_11 : f32 to vector<4x128xf32>
    %14 = arith.maximumf %12, %13 : vector<4x128xf32>
    %c0_12 = arith.constant 0 : index
    %c0_13 = arith.constant 0 : index
    %15 = vector.load %arg6[%c0_12, %c0_13] : memref<3x4xf32, #tpu.memory_space<vmem>>, vector<3x4xf32>
    %cst_14 = arith.constant dense<0.000000e+00> : vector<3x128xf32>
    %16 = tpu.matmul %15, %14, %cst_14 {dimension_numbers = #tpu.dot_dimension_numbers<[1], [0], [0], [1], [0, 0, 1, 1], [], []>} : vector<3x4xf32>, vector<4x128xf32>, vector<3x128xf32> -> vector<3x128xf32>
    %c0_15 = arith.constant 0 : index
    %c0_16 = arith.constant 0 : index
    %17 = vector.load %arg7[%c0_15, %c0_16] : memref<3x1xf32, #tpu.memory_space<vmem>>, vector<3x1xf32>
    %18 = vector.broadcast %17 : vector<3x1xf32> to vector<3x128xf32>
    %19 = arith.addf %16, %18 : vector<3x128xf32>
    %cst_17 = arith.constant 0.000000e+00 : f32
    %20 = vector.broadcast %cst_17 : f32 to vector<3x128xf32>
    %21 = arith.maximumf %19, %20 : vector<3x128xf32>
    %c0_18 = arith.constant 0 : index
    %c0_19 = arith.constant 0 : index
    %22 = vector.load %arg8[%c0_18, %c0_19] : memref<3x3xf32, #tpu.memory_space<vmem>>, vector<3x3xf32>
    %cst_20 = arith.constant dense<0.000000e+00> : vector<3x128xf32>
    %23 = tpu.matmul %22, %21, %cst_20 {dimension_numbers = #tpu.dot_dimension_numbers<[1], [0], [0], [1], [0, 0, 1, 1], [], []>} : vector<3x3xf32>, vector<3x128xf32>, vector<3x128xf32> -> vector<3x128xf32>
    %c0_21 = arith.constant 0 : index
    %c0_22 = arith.constant 0 : index
    %24 = vector.load %arg9[%c0_21, %c0_22] : memref<3x1xf32, #tpu.memory_space<vmem>>, vector<3x1xf32>
    %25 = vector.broadcast %24 : vector<3x1xf32> to vector<3x128xf32>
    %26 = arith.addf %23, %25 : vector<3x128xf32>
    %cst_23 = arith.constant dense<0xFF800000> : vector<128xf32>
    %27 = vector.multi_reduction <maximumf>, %26, %cst_23 [0] : vector<3x128xf32> to vector<128xf32>
    %28 = vector.shape_cast %27 : vector<128xf32> to vector<1x128xf32>
    %29 = vector.broadcast %28 : vector<1x128xf32> to vector<3x128xf32>
    %30 = arith.subf %26, %29 : vector<3x128xf32>
    %31 = math.exp %30 : vector<3x128xf32>
    %cst_24 = arith.constant dense<0.000000e+00> : vector<128xf32>
    %32 = vector.multi_reduction <add>, %31, %cst_24 [0] : vector<3x128xf32> to vector<128xf32>
    %33 = vector.shape_cast %32 : vector<128xf32> to vector<1x128xf32>
    %34 = math.log %33 : vector<1x128xf32>
    %35 = vector.broadcast %34 : vector<1x128xf32> to vector<3x128xf32>
    %36 = arith.subf %30, %35 : vector<3x128xf32>
    %c0_25 = arith.constant 0 : index
    %c0_26 = arith.constant 0 : index
    %37 = vector.load %arg10[%c0_25, %c0_26] : memref<3x128xf32, #tpu.memory_space<vmem>>, vector<3x128xf32>
    tpu.vector_store %arg10[%c0_25, %c0_26], %36 {strides = array<i32>} : memref<3x128xf32, #tpu.memory_space<vmem>>, vector<3x128xf32>,
    return
  }
  func.func @transform_0(%arg0: i32) -> (i32, i32) {
    %c0_i32 = arith.constant 0 : i32
    %c0_i32_0 = arith.constant 0 : i32
    return %c0_i32, %arg0 : i32, i32
  }
  func.func @transform_1(%arg0: i32) -> (i32, i32) {
    %c0_i32 = arith.constant 0 : i32
    %c0_i32_0 = arith.constant 0 : i32
    %c0_i32_1 = arith.constant 0 : i32
    return %c0_i32, %c0_i32_0 : i32, i32
  }
  func.func @transform_2(%arg0: i32) -> (i32, i32) {
    %c0_i32 = arith.constant 0 : i32
    %c0_i32_0 = arith.constant 0 : i32
    %c0_i32_1 = arith.constant 0 : i32
    return %c0_i32, %c0_i32_0 : i32, i32
  }
  func.func @transform_3(%arg0: i32) -> (i32, i32) {
    %c0_i32 = arith.constant 0 : i32
    %c0_i32_0 = arith.constant 0 : i32
    %c0_i32_1 = arith.constant 0 : i32
    return %c0_i32, %c0_i32_0 : i32, i32
  }
  func.func @transform_4(%arg0: i32) -> (i32, i32) {
    %c0_i32 = arith.constant 0 : i32
    %c0_i32_0 = arith.constant 0 : i32
    %c0_i32_1 = arith.constant 0 : i32
    return %c0_i32, %c0_i32_0 : i32, i32
  }
  func.func @transform_5(%arg0: i32) -> (i32, i32) {
    %c0_i32 = arith.constant 0 : i32
    %c0_i32_0 = arith.constant 0 : i32
    %c0_i32_1 = arith.constant 0 : i32
    return %c0_i32, %c0_i32_0 : i32, i32
  }
  func.func @transform_6(%arg0: i32) -> (i32, i32) {
    %c0_i32 = arith.constant 0 : i32
    %c0_i32_0 = arith.constant 0 : i32
    %c0_i32_1 = arith.constant 0 : i32
    return %c0_i32, %c0_i32_0 : i32, i32
  }
  func.func @transform_7(%arg0: i32) -> (i32, i32) {
    %c0_i32 = arith.constant 0 : i32
    %c0_i32_0 = arith.constant 0 : i32
    %c0_i32_1 = arith.constant 0 : i32
    return %c0_i32, %c0_i32_0 : i32, i32
  }
  func.func @transform_8(%arg0: i32) -> (i32, i32) {
    %c0_i32 = arith.constant 0 : i32
    %c0_i32_0 = arith.constant 0 : i32
    %c0_i32_1 = arith.constant 0 : i32
    return %c0_i32, %c0_i32_0 : i32, i32
  }
  func.func @transform_9(%arg0: i32) -> (i32, i32) {
    %c0_i32 = arith.constant 0 : i32
    %c0_i32_0 = arith.constant 0 : i32
    return %c0_i32, %arg0 : i32, i32
  }
}

</mosaic_0001>

<llo_original>
// kernel: tpu_custom_call.1
$region0: #{tpu_custom_call.1}
  #allocation0 [shape = 'u32[]', space=smem, size = 0x4, offset = 0x4, fixed_abs, tag = 'smem constant byte address 0x4 - core index']
  #allocation1 [shape = 'u32[144,128]{1,0:T(1,128)}', space=vmem, size = 0x12000, scoped, tag = 'internal scratch']
  %s0 = inlined_call_operand.vmem [shape: f32[5,128], index: 0, kind: input, shape index: {}]
  %s1 = inlined_call_operand.vmem [shape: f32[5,5], index: 1, kind: input, shape index: {}]
  %s2 = inlined_call_operand.vmem [shape: f32[5,1], index: 2, kind: input, shape index: {}]
  %s3 = inlined_call_operand.vmem [shape: f32[4,5], index: 3, kind: input, shape index: {}]
  %s4 = inlined_call_operand.vmem [shape: f32[4,1], index: 4, kind: input, shape index: {}]
  %s5 = inlined_call_operand.vmem [shape: f32[3,4], index: 5, kind: input, shape index: {}]
  %s6 = inlined_call_operand.vmem [shape: f32[3,1], index: 6, kind: input, shape index: {}]
  %s7 = inlined_call_operand.vmem [shape: f32[3,3], index: 7, kind: input, shape index: {}]
  %s8 = inlined_call_operand.vmem [shape: f32[3,1], index: 8, kind: input, shape index: {}]
  %s9 = inlined_call_operand.hbm [shape: f32[3,128], index: 9, kind: output, shape index: {}]
  %s10 = sld [smem:[#allocation0]]
  $region46: #{tpu_custom_call.1} parent=0
    _
  %s12 = ssub.s32 1, %s10
  %s13 = scalar_select 0, %s12, %s10
  $region1: #{tpu_custom_call.1} parent=0
    #allocation2 [shape = 'u8[2048]{0}', space=vmem, size = 0x800, scoped, tag = 'output window, operand 0, single buffered']
    #allocation3 [shape = 's32[1]{0}', space=sflag, size = 0x4, scoped, tag = 'scoped memory for tpu_custom_call.1']
    %14 = vsyncpa [#allocation3], 0
    // Predicated region
    $region2: #{tpu_custom_call.1} parent=1 // pred_check
      _
    $region3: #{tpu_custom_call.1} parent=1 // pred_check_branch
      %16 = sbr.rel (0) target = $region5
    $region4: #{tpu_custom_call.1} parent=1 // pred_region
      _
    $region5: #{tpu_custom_call.1} parent=1 // pred_fallthru
      _
    // Predicated region
    $region6: #{tpu_custom_call.1} parent=1 // pred_check
      _
    $region7: #{tpu_custom_call.1} parent=1 // pred_check_branch
      %18 = sbr.rel (0) target = $region9
    $region8: #{tpu_custom_call.1} parent=1 // pred_region
      _
    $region9: #{tpu_custom_call.1} parent=1 // pred_fallthru
      _
    // Predicated region
    $region10: #{tpu_custom_call.1} parent=1 // pred_check
      _
    $region11: #{tpu_custom_call.1} parent=1 // pred_check_branch
      %20 = sbr.rel (0) target = $region13
    $region12: #{tpu_custom_call.1} parent=1 // pred_region
      _
    $region13: #{tpu_custom_call.1} parent=1 // pred_fallthru
      _
    // Predicated region
    $region14: #{tpu_custom_call.1} parent=1 // pred_check
      _
    $region15: #{tpu_custom_call.1} parent=1 // pred_check_branch
      %22 = sbr.rel (0) target = $region17
    $region16: #{tpu_custom_call.1} parent=1 // pred_region
      _
    $region17: #{tpu_custom_call.1} parent=1 // pred_fallthru
      _
    // Predicated region
    $region18: #{tpu_custom_call.1} parent=1 // pred_check
      _
    $region19: #{tpu_custom_call.1} parent=1 // pred_check_branch
      %24 = sbr.rel (0) target = $region21
    $region20: #{tpu_custom_call.1} parent=1 // pred_region
      _
    $region21: #{tpu_custom_call.1} parent=1 // pred_fallthru
      _
    // Predicated region
    $region22: #{tpu_custom_call.1} parent=1 // pred_check
      _
    $region23: #{tpu_custom_call.1} parent=1 // pred_check_branch
      %26 = sbr.rel (0) target = $region25
    $region24: #{tpu_custom_call.1} parent=1 // pred_region
      _
    $region25: #{tpu_custom_call.1} parent=1 // pred_fallthru
      _
    // Predicated region
    $region26: #{tpu_custom_call.1} parent=1 // pred_check
      _
    $region27: #{tpu_custom_call.1} parent=1 // pred_check_branch
      %28 = sbr.rel (0) target = $region29
    $region28: #{tpu_custom_call.1} parent=1 // pred_region
      _
    $region29: #{tpu_custom_call.1} parent=1 // pred_fallthru
      _
    // Predicated region
    $region30: #{tpu_custom_call.1} parent=1 // pred_check
      _
    $region31: #{tpu_custom_call.1} parent=1 // pred_check_branch
      %30 = sbr.rel (0) target = $region33
    $region32: #{tpu_custom_call.1} parent=1 // pred_region
      _
    $region33: #{tpu_custom_call.1} parent=1 // pred_fallthru
      _
    // Predicated region
    $region34: #{tpu_custom_call.1} parent=1 // pred_check
      _
    $region35: #{tpu_custom_call.1} parent=1 // pred_check_branch
      %32 = sbr.rel (0) target = $region37
    $region36: #{tpu_custom_call.1} parent=1 // pred_region
      _
    $region37: #{tpu_custom_call.1} parent=1 // pred_fallthru
      _
    %v33 = vld [vmem:[%s0] sm:$0x1f]
    %v34 = vld [vmem:[%s1] sm:$0x1f]
    %v35 = vld [vmem:[%s2] sm:$0x1f]
    %37 = vset.pattern.permute.xlu0 0
    %38 = vperm.xlu0 %37, %v35
    %v39 = vpop.permute.xlu0 %38
    %vm41 = vcmask 39936
    %v43 = vsel %vm41, %v34, 0
    %vm45 = vcmask 1044480
    %v47 = vsel %vm45, %v33, 0
    %49 = vmatprep.subr.mxu0 0.0
    %50 = vmatpush1.msra.mxu0 0.0
    %51 = vmatprep.subr.mxu0 0.0
    %52 = vmatpush1.msra.mxu0 0.0
    %53 = vmatprep.subr.mxu0 0.0
    %54 = vmatpush1.msra.mxu0 0.0
    %55 = vmatprep.subr.mxu0 0.0
    %56 = vmatpush1.msra.mxu0 0.0
    %57 = vmatprep.subr.mxu0 0.0
    %58 = vmatpush1.msra.mxu0 0.0
    %59 = vmatprep.subr.mxu0 0.0
    %60 = vmatpush1.msra.mxu0 0.0
    %61 = vmatprep.subr.mxu0 0.0
    %62 = vmatpush1.msra.mxu0 0.0
    %63 = vmatprep.subr.mxu0 0.0
    %64 = vmatpush1.msra.mxu0 0.0
    %65 = vmatprep.subr.mxu0 0.0
    %66 = vmatpush1.msra.mxu0 0.0
    %67 = vmatprep.subr.mxu0 0.0
    %68 = vmatpush1.msra.mxu0 0.0
    %69 = vmatprep.subr.mxu0 0.0
    %70 = vmatpush1.msra.mxu0 0.0
    %71 = vmatprep.subr.mxu0 0.0
    %72 = vmatpush1.msra.mxu0 0.0
    %73 = vmatprep.subr.mxu0 0.0
    %74 = vmatpush1.msra.mxu0 0.0
    %75 = vmatprep.subr.mxu0 0.0
    %76 = vmatpush1.msra.mxu0 0.0
    %77 = vmatprep.subr.mxu0 0.0
    %78 = vmatpush1.msra.mxu0 0.0
    %79 = vmatprep.subr.mxu0 0.0
    %80 = vmatpush1.msra.mxu0 %v47
    %81 = vmatprep.subr.mxu0 0.0
    %82 = vmatpush2.msra.mxu0 0.0
    %83 = vmatprep.subr.mxu0 0.0
    %84 = vmatpush2.msra.mxu0 0.0
    %85 = vmatprep.subr.mxu0 0.0
    %86 = vmatpush2.msra.mxu0 0.0
    %87 = vmatprep.subr.mxu0 0.0
    %88 = vmatpush2.msra.mxu0 0.0
    %89 = vmatprep.subr.mxu0 0.0
    %90 = vmatpush2.msra.mxu0 0.0
    %91 = vmatprep.subr.mxu0 0.0
    %92 = vmatpush2.msra.mxu0 0.0
    %93 = vmatprep.subr.mxu0 0.0
    %94 = vmatpush2.msra.mxu0 0.0
    %95 = vmatprep.subr.mxu0 0.0
    %96 = vmatpush2.msra.mxu0 0.0
    %97 = vmatprep.subr.mxu0 0.0
    %98 = vmatpush2.msra.mxu0 0.0
    %99 = vmatprep.subr.mxu0 0.0
    %100 = vmatpush2.msra.mxu0 0.0
    %101 = vmatprep.subr.mxu0 0.0
    %102 = vmatpush2.msra.mxu0 0.0
    %103 = vmatprep.subr.mxu0 0.0
    %104 = vmatpush2.msra.mxu0 0.0
    %105 = vmatprep.subr.mxu0 0.0
    %106 = vmatpush2.msra.mxu0 0.0
    %107 = vmatprep.subr.mxu0 0.0
    %108 = vmatpush2.msra.mxu0 0.0
    %109 = vmatprep.subr.mxu0 0.0
    %110 = vmatpush2.msra.mxu0 0.0
    %111 = vmatprep.subr.mxu0 0.0
    %112 = vmatpush2.msra.mxu0 0.0
    %113 = vmatprep.mubr.f32.mxu0 0.0
    %114 = vmatmul.mubr.f32.gmra.mxu0 %v43
    %v115 = vpop.f32.mrf.mxu0
    %v116 = vadd.f32 %v39, %v115
    %v117 = vpop.f32.mrf.mxu0
    %118 = vdwg.mxu0
    %v119 = vmax.f32 %v116, 0.0
    %v120 = vld [vmem:[%s3] sm:$0xf]
    %v121 = vld [vmem:[%s4] sm:$0xf]
    %123 = vset.pattern.permute.xlu0 0
    %124 = vperm.xlu0 %123, %v121
    %v125 = vpop.permute.xlu0 %124
    %v128 = vsel %vm41, %v120, 0
    %v131 = vsel %vm45, %v119, 0
    %133 = vmatprep.subr.mxu0 0.0
    %134 = vmatpush1.msra.mxu0 0.0
    %135 = vmatprep.subr.mxu0 0.0
    %136 = vmatpush1.msra.mxu0 0.0
    %137 = vmatprep.subr.mxu0 0.0
    %138 = vmatpush1.msra.mxu0 0.0
    %139 = vmatprep.subr.mxu0 0.0
    %140 = vmatpush1.msra.mxu0 0.0
    %141 = vmatprep.subr.mxu0 0.0
    %142 = vmatpush1.msra.mxu0 0.0
    %143 = vmatprep.subr.mxu0 0.0
    %144 = vmatpush1.msra.mxu0 0.0
    %145 = vmatprep.subr.mxu0 0.0
    %146 = vmatpush1.msra.mxu0 0.0
    %147 = vmatprep.subr.mxu0 0.0
    %148 = vmatpush1.msra.mxu0 0.0
    %149 = vmatprep.subr.mxu0 0.0
    %150 = vmatpush1.msra.mxu0 0.0
    %151 = vmatprep.subr.mxu0 0.0
    %152 = vmatpush1.msra.mxu0 0.0
    %153 = vmatprep.subr.mxu0 0.0
    %154 = vmatpush1.msra.mxu0 0.0
    %155 = vmatprep.subr.mxu0 0.0
    %156 = vmatpush1.msra.mxu0 0.0
    %157 = vmatprep.subr.mxu0 0.0
    %158 = vmatpush1.msra.mxu0 0.0
    %159 = vmatprep.subr.mxu0 0.0
    %160 = vmatpush1.msra.mxu0 0.0
    %161 = vmatprep.subr.mxu0 0.0
    %162 = vmatpush1.msra.mxu0 0.0
    %163 = vmatprep.subr.mxu0 0.0
    %164 = vmatpush1.msra.mxu0 %v131
    %165 = vmatprep.subr.mxu0 0.0
    %166 = vmatpush2.msra.mxu0 0.0
    %167 = vmatprep.subr.mxu0 0.0
    %168 = vmatpush2.msra.mxu0 0.0
    %169 = vmatprep.subr.mxu0 0.0
    %170 = vmatpush2.msra.mxu0 0.0
    %171 = vmatprep.subr.mxu0 0.0
    %172 = vmatpush2.msra.mxu0 0.0
    %173 = vmatprep.subr.mxu0 0.0
    %174 = vmatpush2.msra.mxu0 0.0
    %175 = vmatprep.subr.mxu0 0.0
    %176 = vmatpush2.msra.mxu0 0.0
    %177 = vmatprep.subr.mxu0 0.0
    %178 = vmatpush2.msra.mxu0 0.0
    %179 = vmatprep.subr.mxu0 0.0
    %180 = vmatpush2.msra.mxu0 0.0
    %181 = vmatprep.subr.mxu0 0.0
    %182 = vmatpush2.msra.mxu0 0.0
    %183 = vmatprep.subr.mxu0 0.0
    %184 = vmatpush2.msra.mxu0 0.0
    %185 = vmatprep.subr.mxu0 0.0
    %186 = vmatpush2.msra.mxu0 0.0
    %187 = vmatprep.subr.mxu0 0.0
    %188 = vmatpush2.msra.mxu0 0.0
    %189 = vmatprep.subr.mxu0 0.0
    %190 = vmatpush2.msra.mxu0 0.0
    %191 = vmatprep.subr.mxu0 0.0
    %192 = vmatpush2.msra.mxu0 0.0
    %193 = vmatprep.subr.mxu0 0.0
    %194 = vmatpush2.msra.mxu0 0.0
    %195 = vmatprep.subr.mxu0 0.0
    %196 = vmatpush2.msra.mxu0 0.0
    %197 = vmatprep.mubr.f32.mxu0 0.0
    %198 = vmatmul.mubr.f32.gmra.mxu0 %v128
    %v199 = vpop.f32.mrf.mxu0
    %v200 = vadd.f32 %v125, %v199
    %v201 = vpop.f32.mrf.mxu0
    %202 = vdwg.mxu0
    %v203 = vmax.f32 %v200, 0.0
    %v204 = vld [vmem:[%s5] sm:$0x7]
    %v205 = vld [vmem:[%s6] sm:$0x7]
    %207 = vset.pattern.permute.xlu0 0
    %208 = vperm.xlu0 %207, %v205
    %v209 = vpop.permute.xlu0 %208
    %vm211 = vcmask 31744
    %v213 = vsel %vm211, %v204, 0
    %vm215 = vcmask 1043456
    %v217 = vsel %vm215, %v203, 0
    %219 = vmatprep.subr.mxu0 0.0
    %220 = vmatpush1.msra.mxu0 0.0
    %221 = vmatprep.subr.mxu0 0.0
    %222 = vmatpush1.msra.mxu0 0.0
    %223 = vmatprep.subr.mxu0 0.0
    %224 = vmatpush1.msra.mxu0 0.0
    %225 = vmatprep.subr.mxu0 0.0
    %226 = vmatpush1.msra.mxu0 0.0
    %227 = vmatprep.subr.mxu0 0.0
    %228 = vmatpush1.msra.mxu0 0.0
    %229 = vmatprep.subr.mxu0 0.0
    %230 = vmatpush1.msra.mxu0 0.0
    %231 = vmatprep.subr.mxu0 0.0
    %232 = vmatpush1.msra.mxu0 0.0
    %233 = vmatprep.subr.mxu0 0.0
    %234 = vmatpush1.msra.mxu0 0.0
    %235 = vmatprep.subr.mxu0 0.0
    %236 = vmatpush1.msra.mxu0 0.0
    %237 = vmatprep.subr.mxu0 0.0
    %238 = vmatpush1.msra.mxu0 0.0
    %239 = vmatprep.subr.mxu0 0.0
    %240 = vmatpush1.msra.mxu0 0.0
    %241 = vmatprep.subr.mxu0 0.0
    %242 = vmatpush1.msra.mxu0 0.0
    %243 = vmatprep.subr.mxu0 0.0
    %244 = vmatpush1.msra.mxu0 0.0
    %245 = vmatprep.subr.mxu0 0.0
    %246 = vmatpush1.msra.mxu0 0.0
    %247 = vmatprep.subr.mxu0 0.0
    %248 = vmatpush1.msra.mxu0 0.0
    %249 = vmatprep.subr.mxu0 0.0
    %250 = vmatpush1.msra.mxu0 %v217
    %251 = vmatprep.subr.mxu0 0.0
    %252 = vmatpush2.msra.mxu0 0.0
    %253 = vmatprep.subr.mxu0 0.0
    %254 = vmatpush2.msra.mxu0 0.0
    %255 = vmatprep.subr.mxu0 0.0
    %256 = vmatpush2.msra.mxu0 0.0
    %257 = vmatprep.subr.mxu0 0.0
    %258 = vmatpush2.msra.mxu0 0.0
    %259 = vmatprep.subr.mxu0 0.0
    %260 = vmatpush2.msra.mxu0 0.0
    %261 = vmatprep.subr.mxu0 0.0
    %262 = vmatpush2.msra.mxu0 0.0
    %263 = vmatprep.subr.mxu0 0.0
    %264 = vmatpush2.msra.mxu0 0.0
    %265 = vmatprep.subr.mxu0 0.0
    %266 = vmatpush2.msra.mxu0 0.0
    %267 = vmatprep.subr.mxu0 0.0
    %268 = vmatpush2.msra.mxu0 0.0
    %269 = vmatprep.subr.mxu0 0.0
    %270 = vmatpush2.msra.mxu0 0.0
    %271 = vmatprep.subr.mxu0 0.0
    %272 = vmatpush2.msra.mxu0 0.0
    %273 = vmatprep.subr.mxu0 0.0
    %274 = vmatpush2.msra.mxu0 0.0
    %275 = vmatprep.subr.mxu0 0.0
    %276 = vmatpush2.msra.mxu0 0.0
    %277 = vmatprep.subr.mxu0 0.0
    %278 = vmatpush2.msra.mxu0 0.0
    %279 = vmatprep.subr.mxu0 0.0
    %280 = vmatpush2.msra.mxu0 0.0
    %281 = vmatprep.subr.mxu0 0.0
    %282 = vmatpush2.msra.mxu0 0.0
    %283 = vmatprep.mubr.f32.mxu0 0.0
    %284 = vmatmul.mubr.f32.gmra.mxu0 %v213
    %v285 = vpop.f32.mrf.mxu0
    %v286 = vadd.f32 %v209, %v285
    %v287 = vpop.f32.mrf.mxu0
    %288 = vdwg.mxu0
    %v289 = vmax.f32 %v286, 0.0
    %v290 = vld [vmem:[%s7] sm:$0x7]
    %v291 = vld [vmem:[%s8] sm:$0x7]
    %293 = vset.pattern.permute.xlu0 0
    %294 = vperm.xlu0 %293, %v291
    %v295 = vpop.permute.xlu0 %294
    %vm297 = vcmask 23552
    %v299 = vsel %vm297, %v290, 0
    %vm301 = vcmask 1042432
    %v303 = vsel %vm301, %v289, 0
    %305 = vmatprep.subr.mxu0 0.0
    %306 = vmatpush1.msra.mxu0 0.0
    %307 = vmatprep.subr.mxu0 0.0
    %308 = vmatpush1.msra.mxu0 0.0
    %309 = vmatprep.subr.mxu0 0.0
    %310 = vmatpush1.msra.mxu0 0.0
    %311 = vmatprep.subr.mxu0 0.0
    %312 = vmatpush1.msra.mxu0 0.0
    %313 = vmatprep.subr.mxu0 0.0
    %314 = vmatpush1.msra.mxu0 0.0
    %315 = vmatprep.subr.mxu0 0.0
    %316 = vmatpush1.msra.mxu0 0.0
    %317 = vmatprep.subr.mxu0 0.0
    %318 = vmatpush1.msra.mxu0 0.0
    %319 = vmatprep.subr.mxu0 0.0
    %320 = vmatpush1.msra.mxu0 0.0
    %321 = vmatprep.subr.mxu0 0.0
    %322 = vmatpush1.msra.mxu0 0.0
    %323 = vmatprep.subr.mxu0 0.0
    %324 = vmatpush1.msra.mxu0 0.0
    %325 = vmatprep.subr.mxu0 0.0
    %326 = vmatpush1.msra.mxu0 0.0
    %327 = vmatprep.subr.mxu0 0.0
    %328 = vmatpush1.msra.mxu0 0.0
    %329 = vmatprep.subr.mxu0 0.0
    %330 = vmatpush1.msra.mxu0 0.0
    %331 = vmatprep.subr.mxu0 0.0
    %332 = vmatpush1.msra.mxu0 0.0
    %333 = vmatprep.subr.mxu0 0.0
    %334 = vmatpush1.msra.mxu0 0.0
    %335 = vmatprep.subr.mxu0 0.0
    %336 = vmatpush1.msra.mxu0 %v303
    %337 = vmatprep.subr.mxu0 0.0
    %338 = vmatpush2.msra.mxu0 0.0
    %339 = vmatprep.subr.mxu0 0.0
    %340 = vmatpush2.msra.mxu0 0.0
    %341 = vmatprep.subr.mxu0 0.0
    %342 = vmatpush2.msra.mxu0 0.0
    %343 = vmatprep.subr.mxu0 0.0
    %344 = vmatpush2.msra.mxu0 0.0
    %345 = vmatprep.subr.mxu0 0.0
    %346 = vmatpush2.msra.mxu0 0.0
    %347 = vmatprep.subr.mxu0 0.0
    %348 = vmatpush2.msra.mxu0 0.0
    %349 = vmatprep.subr.mxu0 0.0
    %350 = vmatpush2.msra.mxu0 0.0
    %351 = vmatprep.subr.mxu0 0.0
    %352 = vmatpush2.msra.mxu0 0.0
    %353 = vmatprep.subr.mxu0 0.0
    %354 = vmatpush2.msra.mxu0 0.0
    %355 = vmatprep.subr.mxu0 0.0
    %356 = vmatpush2.msra.mxu0 0.0
    %357 = vmatprep.subr.mxu0 0.0
    %358 = vmatpush2.msra.mxu0 0.0
    %359 = vmatprep.subr.mxu0 0.0
    %360 = vmatpush2.msra.mxu0 0.0
    %361 = vmatprep.subr.mxu0 0.0
    %362 = vmatpush2.msra.mxu0 0.0
    %363 = vmatprep.subr.mxu0 0.0
    %364 = vmatpush2.msra.mxu0 0.0
    %365 = vmatprep.subr.mxu0 0.0
    %366 = vmatpush2.msra.mxu0 0.0
    %367 = vmatprep.subr.mxu0 0.0
    %368 = vmatpush2.msra.mxu0 0.0
    %369 = vmatprep.mubr.f32.mxu0 0.0
    %370 = vmatmul.mubr.f32.gmra.mxu0 %v299
    %v371 = vpop.f32.mrf.mxu0
    %v372 = vadd.f32 %v295, %v371
    %v373 = vpop.f32.mrf.mxu0
    %374 = vdwg.mxu0
    %v375 = vsel %vm301, %v372, -inf
    %v376 = vrot.slane %v375, 4
    %v377 = vmax.f32 %v375, %v376
    %v378 = vrot.slane %v377, 2
    %v379 = vmax.f32 %v377, %v378
    %v380 = vrot.slane %v379, 1
    %v381 = vmax.f32 %v379, %v380
    %v382 = vsub.f32 %v372, %v381
    %v383 = vmul.f32 %v382, 1.442695
    %v384 = vpow.pop %v383
    %v385 = vsel %vm301, %v384, 0.0
    %v386 = vrot.slane %v385, 4
    %v387 = vadd.f32 %v385, %v386
    %v388 = vrot.slane %v387, 2
    %v389 = vadd.f32 %v387, %v388
    %v390 = vrot.slane %v389, 1
    %v391 = vadd.f32 %v389, %v390
    %v392 = vlog2.pop %v391
    %v393 = vmul.f32 %v392, 0.6931472
    %v394 = vsub.f32 %v382, %v393
    %395 = vst [vmem:[#allocation2] sm:$0x7] %v394
    // Predicated region
    $region38: #{tpu_custom_call.1} parent=1 // pred_check
      _
    $region39: #{tpu_custom_call.1} parent=1 // pred_check_branch
      %397 = sbr.rel (0) target = $region41
    $region40: #{tpu_custom_call.1} parent=1 // pred_region
      %s399 = ssub.s32 64, 64
      %400 = vsyncadd [#allocation3], %s399
      %s402 = sshll.u32 [#allocation2], 4
      %s403 = int_to_ptr.vmem [resolvable:$true] %s402
      %405 = dma.vmem_to_hbm [thread:$0]  %s403, 64, %s9, [#allocation3]
    $region41: #{tpu_custom_call.1} parent=1 // pred_fallthru
      _
    // Predicated region
    $region42: #{tpu_custom_call.1} parent=1 // pred_check
      _
    $region43: #{tpu_custom_call.1} parent=1 // pred_check_branch
      %407 = sbr.rel (0) target = $region45
    $region44: #{tpu_custom_call.1} parent=1 // pred_region
      %408 = dma.done [#allocation3], 64
    $region45: #{tpu_custom_call.1} parent=1 // pred_fallthru
      _
    %409 = vsyncpa [#allocation3], 1

</llo_original>
